<compile_context>
chip_gen: v7x
topology: tpu7x:2x2x1
jax: 0.10.0
libtpu: 0.0.40
codegen_flags: <defaults>
</compile_context>

<pallas_src>
from functools import partial

import jax
import jax.numpy as jnp
import numpy as np
from jax.experimental import pallas as pl
from jax.experimental.pallas import tpu as pltpu


def dhs_moe_rbf_kernel(hidden_ref, dists_ref, offsets_ref, coeffs_ref,
                       w_emb_ref, w_rbf_ref, b_ref, out_ref, emb_acc,
                       *, n_feats, seq_len):
    """Grid = (batch-tile 'parallel', sequence-tile 'arbitrary' reduction)."""
    l = pl.program_id(1)

    @pl.when(l == 0)
    def _():
        emb_acc[...] = jnp.zeros_like(emb_acc)

    # Accumulate the sequence-sum of this L tile (mean-pool numerator).
    # hidden streams in bf16; accumulate in f32 (explicit upcast so v5e's
    # f32-only VALU path is also well defined).
    emb_acc[...] += jnp.sum(hidden_ref[...].astype(jnp.float32), axis=1)

    @pl.when(l == pl.num_programs(1) - 1)
    def _():
        # embeddings = outputs[0].mean(dim=1)
        emb = emb_acc[...] * (1.0 / seq_len)                        # (tb, D)

        # One fused all-experts matmul; contraction split into lane-aligned
        # slabs so no concatenated scratch / masked stores are needed.
        acc = jnp.dot(emb, w_emb_ref[...],
                      preferred_element_type=jnp.float32)           # (tb, Npad)

        for f in range(n_feats):                                    # static unroll
            # GaussianSmearing: exp(coeff * (dist - offset)^2)
            diff = dists_ref[:, f:f + 1] - offsets_ref[f:f + 1, :]  # (tb, RBF)
            rbf = jnp.exp(coeffs_ref[f] * diff * diff)              # (tb, RBF)
            acc = acc + jnp.dot(rbf, w_rbf_ref[f],
                                preferred_element_type=jnp.float32)

        out_ref[...] = (acc + b_ref[...]).astype(out_ref.dtype)


def dhs_moe_rbf_predictions(hidden, dists, offsets, coeffs, W, b,
                            *, tile_l=1024, tile_b=None,
                            vmem_budget_bytes=48 * 1024 * 1024):
    """Returns torch.cat(predictions_per_component, dim=0): shape (E*B, OUT)."""
    B, L, D = hidden.shape
    F = dists.shape[1]
    RBF = offsets.shape[1]
    E, Dx, OUT = W.shape
    assert Dx == D + F * RBF

    # --- batch tiling: 'parallel' grid axis so v7x's 2 TCs split the work ---
    if tile_b is None:
        tile_b = B // 2 if (B % 16 == 0) else B
    assert B % tile_b == 0
    assert tile_b == B or tile_b % 8 == 0, "batch tile must be 8-aligned or full"
    num_b = B // tile_b

    # Repack all expert heads into one lane-dense weight matrix (Dx, E*OUT),
    # zero-padded to a multiple of 128 lanes, then split per input slab.
    N = E * OUT
    n_pad = pl.cdiv(N, 128) * 128
    w_packed = jnp.transpose(W, (1, 0, 2)).reshape(Dx, N).astype(jnp.float32)
    w_packed = jnp.pad(w_packed, ((0, 0), (0, n_pad - N)))
    w_emb = w_packed[:D, :]                                  # (D, Npad)
    w_rbf = w_packed[D:, :].reshape(F, RBF, n_pad)           # (F, RBF, Npad)
    b_packed = jnp.pad(b.reshape(N).astype(jnp.float32),
                       (0, n_pad - N)).reshape(1, n_pad)

    # --- stream hidden as bf16 (f32 accumulation inside the kernel) ---
    hidden_bf16 = hidden.astype(jnp.bfloat16)
    hidden_itemsize = 2

    # --- VMEM footprint of everything except the pipelined hidden stream ---
    static_bytes = (
        D * n_pad * 4                    # w_emb (single-buffered)
        + F * RBF * n_pad * 4            # w_rbf (single-buffered)
        + max(F, 8) * RBF * 4            # offsets (single-buffered)
        + 8 * n_pad * 4                  # bias row (sublane-padded)
        + 2 * max(tile_b, 8) * 128 * 4   # dists (tiny, double-buffered)
        + 2 * tile_b * n_pad * 4         # output block (double-buffered)
        + tile_b * D * 4                 # mean-pool accumulator scratch
    )

    # --- derive tile_l so the double-buffered hidden stream fits the budget ---
    per_seq_row = 2 * tile_b * D * hidden_itemsize
    cap = max(1, (vmem_budget_bytes - static_bytes) // per_seq_row)
    cap = int(min(cap, tile_l, L))
    tile_l = L
    for cand in range(cap, 0, -1):       # largest divisor of L within budget
        if L % cand == 0:
            tile_l = cand
            break
    num_l = L // tile_l

    est_vmem = static_bytes + 2 * tile_b * tile_l * D * hidden_itemsize
    # Explicit scoped-VMEM limit (defaults are 16/32 MiB); cap at v7x's 64 MiB
    # physical VMEM (v5e/v6e have 128 MiB headroom, 64 MiB is safe everywhere).
    vmem_limit = int(min(64 * 1024 * 1024,
                         max(32 * 1024 * 1024, est_vmem + 8 * 1024 * 1024)))

    kernel = partial(dhs_moe_rbf_kernel, n_feats=F, seq_len=float(L))

    # Deepen the hidden pipeline only when tiles ended up small (latency regime).
    if num_l >= 4 and tile_l <= 256:
        hidden_spec = pl.BlockSpec((tile_b, tile_l, D),
                                   lambda bb, ll: (bb, ll, 0),
                                   pipeline_mode=pl.Buffered(3))
    else:
        hidden_spec = pl.BlockSpec((tile_b, tile_l, D),
                                   lambda bb, ll: (bb, ll, 0))

    out_pad = pl.pallas_call(
        kernel,
        out_shape=jax.ShapeDtypeStruct((B, n_pad), jnp.float32),
        grid=(num_b, num_l),
        in_specs=[
            hidden_spec,                                            # token hiddens (bf16)
            pl.BlockSpec((tile_b, F), lambda bb, ll: (bb, 0)),      # scalar feats
            pl.BlockSpec((F, RBF), lambda bb, ll: (0, 0),           # RBF offsets
                         pipeline_mode=pl.Buffered(1)),
            pl.BlockSpec(memory_space=pltpu.MemorySpace.SMEM),      # RBF coeffs
            pl.BlockSpec((D, n_pad), lambda bb, ll: (0, 0),         # W rows: emb
                         pipeline_mode=pl.Buffered(1)),
            pl.BlockSpec((F, RBF, n_pad), lambda bb, ll: (0, 0, 0), # W rows: rbf
                         pipeline_mode=pl.Buffered(1)),
            pl.BlockSpec((1, n_pad), lambda bb, ll: (0, 0),         # all biases
                         pipeline_mode=pl.Buffered(1)),
        ],
        out_specs=pl.BlockSpec((tile_b, n_pad), lambda bb, ll: (bb, 0)),
        scratch_shapes=[pltpu.VMEM((tile_b, D), jnp.float32)],      # mean-pool acc
        compiler_params=pltpu.CompilerParams(
            dimension_semantics=("parallel", "arbitrary"),
            vmem_limit_bytes=vmem_limit),
    )(hidden_bf16, dists, offsets, coeffs.astype(jnp.float32),
      w_emb, w_rbf, b_packed)

    # (B, E*OUT) lane-dense slab -> expert-major (E*B, OUT), i.e.
    # torch.cat(predictions_per_component, dim=0). Pure reshape/transpose glue.
    out = out_pad[:, :N].reshape(B, E, OUT)
    return jnp.transpose(out, (1, 0, 2)).reshape(E * B, OUT)


def dhs_moe_rbf_forward(hidden, dists, offsets, coeffs, W, b, component_idx):
    """Full forward, including the index shuffle from the reference module."""
    preds_cat = dhs_moe_rbf_predictions(hidden, dists, offsets, coeffs, W, b)
    # torch.cat(comp_idx) == stable argsort of component_idx;
    # indexing by argsort of that == its inverse permutation.
    perm = jnp.argsort(component_idx, stable=True)
    inv = jnp.argsort(perm, stable=True)
    return preds_cat[inv]


def reference_forward(hidden, dists, offsets, coeffs, W, b, component_idx):
    """Pure-JAX reproduction of the PyTorch forward semantics (f32)."""
    emb = hidden.mean(axis=1)
    feats = []
    for f in range(dists.shape[1]):
        diff = dists[:, f:f + 1] - offsets[f][None, :]
        feats.append(jnp.exp(coeffs[f] * diff * diff))
    features = jnp.concatenate(feats, axis=1).astype(jnp.float32)
    x = jnp.concatenate([emb, features], axis=1)
    preds_per_comp = [x @ W[e] + b[e][None, :] for e in range(W.shape[0])]
    preds_cat = jnp.concatenate(preds_per_comp, axis=0)
    perm = jnp.argsort(component_idx, stable=True)
    inv = jnp.argsort(perm, stable=True)
    return preds_cat[inv]


if __name__ == "__main__":
    # Small, module-consistent shapes.
    B, L, D = 8, 8, 32          # batch, seq len, DNA-encoder hidden size
    F = 2                        # len(feature_columns)
    RBF = 128                    # rbf_dimension
    E = 4                        # ncomponents (experts)
    OUT = 1                      # detector output per sample
    Dx = D + F * RBF

    key = jax.random.PRNGKey(0)
    k1, k2, k3, k4, k5 = jax.random.split(key, 5)

    # Synthetic DNA token hidden states (stand-in for DNABERT outputs[0]).
    hidden = jax.random.normal(k1, (B, L, D), dtype=jnp.float32)
    # Additional scalar feature columns, in the RBF cutoff range [0, 10].
    dists = jax.random.uniform(k2, (B, F), minval=0.0, maxval=10.0,
                               dtype=jnp.float32)
    component_idx = jax.random.randint(k3, (B,), 0, E, dtype=jnp.int32)

    # GaussianSmearing parameters: linspace(0, 10, RBF), coeff = -0.5/delta^2.
    offset_1d = jnp.linspace(0.0, 10.0, RBF, dtype=jnp.float32)
    offsets = jnp.tile(offset_1d[None, :], (F, 1))                  # (F, RBF)
    delta = offset_1d[1] - offset_1d[0]
    coeffs = jnp.full((F,), -0.5 / (delta * delta), dtype=jnp.float32)

    # Deterministic per-expert linear classifier heads.
    W = 0.02 * jax.random.normal(k4, (E, Dx, OUT), dtype=jnp.float32)
    b = 0.01 * jax.random.normal(k5, (E, OUT), dtype=jnp.float32)

    out = dhs_moe_rbf_forward(hidden, dists, offsets, coeffs, W, b,
                              component_idx)
    out = jax.block_until_ready(out)

    ref = reference_forward(hidden, dists, offsets, coeffs, W, b,
                            component_idx)
    # bf16 streaming of hidden (f32 accumulation) -> looser tolerance vs the
    # full-f32 reference.
    np.testing.assert_allclose(np.asarray(out), np.asarray(ref),
                               rtol=1e-2, atol=1e-2)
    print("KERNEL_OK")
</pallas_src>

<mosaic_0001>
module attributes {stable_mosaic.version = 11 : i64} {
  func.func @dhs_moe_rbf_kernel(%arg0: i32, %arg1: i32, %arg2: memref<8x8x32xbf16, #tpu.memory_space<vmem>>, %arg3: memref<8x2xf32, #tpu.memory_space<vmem>>, %arg4: memref<2x128xf32, #tpu.memory_space<vmem>>, %arg5: memref<2xf32, #tpu.memory_space<smem>>, %arg6: memref<32x128xf32, #tpu.memory_space<vmem>>, %arg7: memref<2x128x128xf32, #tpu.memory_space<vmem>>, %arg8: memref<1x128xf32, #tpu.memory_space<vmem>>, %arg9: memref<8x128xf32, #tpu.memory_space<vmem>>, %arg10: memref<8x32xf32, #tpu.memory_space<vmem>>) attributes {dimension_semantics = [#tpu.dimension_semantics<parallel>, #tpu.dimension_semantics<arbitrary>], iteration_bounds = array<i64: 1, 1>, scalar_prefetch = 0 : i64, scratch_operands = 1 : i64, tpu.core_type = #tpu.core_type<tc>, window_params = [{transform_indices = @transform_0, window_bounds = array<i64: 8, 8, 32>}, {transform_indices = @transform_1, window_bounds = array<i64: 8, 2>}, {pipeline_mode = #tpu.pipeline_mode<synchronous>, transform_indices = @transform_2, window_bounds = array<i64: 2, 128>}, {transform_indices = @transform_3, window_bounds = array<i64: 2>}, {pipeline_mode = #tpu.pipeline_mode<synchronous>, transform_indices = @transform_4, window_bounds = array<i64: 32, 128>}, {pipeline_mode = #tpu.pipeline_mode<synchronous>, transform_indices = @transform_5, window_bounds = array<i64: 2, 128, 128>}, {pipeline_mode = #tpu.pipeline_mode<synchronous>, transform_indices = @transform_6, window_bounds = array<i64: 1, 128>}, {transform_indices = @transform_7, window_bounds = array<i64: 8, 128>}]} {
    %c0_i32 = arith.constant 0 : i32
    %0 = arith.cmpi eq, %arg1, %c0_i32 : i32
    %1 = arith.extui %0 : i1 to i32
    %c0_i32_0 = arith.constant 0 : i32
    %2 = arith.cmpi ne, %1, %c0_i32_0 : i32
    scf.if %2 {
      %cst_9 = arith.constant 0.000000e+00 : f32
      %12 = vector.broadcast %cst_9 : f32 to vector<8x32xf32>
      %c0_10 = arith.constant 0 : index
      %c0_11 = arith.constant 0 : index
      %13 = vector.load %arg10[%c0_10, %c0_11] : memref<8x32xf32, #tpu.memory_space<vmem>>, vector<8x32xf32>
      tpu.vector_store %arg10[%c0_10, %c0_11], %12 {strides = array<i32>} : memref<8x32xf32, #tpu.memory_space<vmem>>, vector<8x32xf32>,
    } else {
    }
    %c0 = arith.constant 0 : index
    %c0_1 = arith.constant 0 : index
    %3 = vector.load %arg10[%c0, %c0_1] : memref<8x32xf32, #tpu.memory_space<vmem>>, vector<8x32xf32>
    %c0_2 = arith.constant 0 : index
    %c0_3 = arith.constant 0 : index
    %c0_4 = arith.constant 0 : index
    %4 = vector.load %arg2[%c0_2, %c0_3, %c0_4] : memref<8x8x32xbf16, #tpu.memory_space<vmem>>, vector<8x8x32xbf16>
    %5 = arith.extf %4 : vector<8x8x32xbf16> to vector<8x8x32xf32>
    %cst = arith.constant dense<0.000000e+00> : vector<8x32xf32>
    %6 = vector.multi_reduction <add>, %5, %cst [1] : vector<8x8x32xf32> to vector<8x32xf32>
    %7 = arith.addf %3, %6 : vector<8x32xf32>
    %c0_5 = arith.constant 0 : index
    %c0_6 = arith.constant 0 : index
    %8 = vector.load %arg10[%c0_5, %c0_6] : memref<8x32xf32, #tpu.memory_space<vmem>>, vector<8x32xf32>
    tpu.vector_store %arg10[%c0_5, %c0_6], %7 {strides = array<i32>} : memref<8x32xf32, #tpu.memory_space<vmem>>, vector<8x32xf32>,
    %c0_i32_7 = arith.constant 0 : i32
    %9 = arith.cmpi eq, %arg1, %c0_i32_7 : i32
    %10 = arith.extui %9 : i1 to i32
    %c0_i32_8 = arith.constant 0 : i32
    %11 = arith.cmpi ne, %10, %c0_i32_8 : i32
    scf.if %11 {
      %c0_9 = arith.constant 0 : index
      %c0_10 = arith.constant 0 : index
      %12 = vector.load %arg10[%c0_9, %c0_10] : memref<8x32xf32, #tpu.memory_space<vmem>>, vector<8x32xf32>
      %cst_11 = arith.constant 1.250000e-01 : f32
      %13 = vector.broadcast %cst_11 : f32 to vector<8x32xf32>
      %14 = arith.mulf %12, %13 : vector<8x32xf32>
      %c0_12 = arith.constant 0 : index
      %c0_13 = arith.constant 0 : index
      %15 = vector.load %arg6[%c0_12, %c0_13] : memref<32x128xf32, #tpu.memory_space<vmem>>, vector<32x128xf32>
      %cst_14 = arith.constant dense<0.000000e+00> : vector<8x128xf32>
      %16 = tpu.matmul %14, %15, %cst_14 {dimension_numbers = #tpu.dot_dimension_numbers<[1], [0], [0], [1], [0, 0, 1, 1], [], []>} : vector<8x32xf32>, vector<32x128xf32>, vector<8x128xf32> -> vector<8x128xf32>
      %c0_15 = arith.constant 0 : index
      %c0_16 = arith.constant 0 : index
      %17 = vector.load %arg3[%c0_15, %c0_16] : memref<8x2xf32, #tpu.memory_space<vmem>>, vector<8x1xf32>
      %c0_17 = arith.constant 0 : index
      %c0_18 = arith.constant 0 : index
      %18 = vector.load %arg4[%c0_17, %c0_18] : memref<2x128xf32, #tpu.memory_space<vmem>>, vector<1x128xf32>
      %19 = vector.broadcast %17 : vector<8x1xf32> to vector<8x128xf32>
      %20 = vector.broadcast %18 : vector<1x128xf32> to vector<8x128xf32>
      %21 = arith.subf %19, %20 : vector<8x128xf32>
      %c0_19 = arith.constant 0 : index
      %22 = memref.load %arg5[%c0_19] : memref<2xf32, #tpu.memory_space<smem>>
      %23 = vector.broadcast %22 : f32 to vector<8x128xf32>
      %24 = arith.mulf %23, %21 : vector<8x128xf32>
      %25 = arith.mulf %24, %21 : vector<8x128xf32>
      %26 = math.exp %25 : vector<8x128xf32>
      %c0_20 = arith.constant 0 : index
      %c0_21 = arith.constant 0 : index
      %c0_22 = arith.constant 0 : index
      %27 = vector.load %arg7[%c0_20, %c0_21, %c0_22] : memref<2x128x128xf32, #tpu.memory_space<vmem>>, vector<1x128x128xf32>
      %28 = vector.shape_cast %27 : vector<1x128x128xf32> to vector<128x128xf32>
      %cst_23 = arith.constant dense<0.000000e+00> : vector<8x128xf32>
      %29 = tpu.matmul %26, %28, %cst_23 {dimension_numbers = #tpu.dot_dimension_numbers<[1], [0], [0], [1], [0, 0, 1, 1], [], []>} : vector<8x128xf32>, vector<128x128xf32>, vector<8x128xf32> -> vector<8x128xf32>
      %30 = arith.addf %16, %29 : vector<8x128xf32>
      %c0_24 = arith.constant 0 : index
      %c1 = arith.constant 1 : index
      %31 = vector.load %arg3[%c0_24, %c1] : memref<8x2xf32, #tpu.memory_space<vmem>>, vector<8x1xf32>
      %c1_25 = arith.constant 1 : index
      %c0_26 = arith.constant 0 : index
      %32 = vector.load %arg4[%c1_25, %c0_26] : memref<2x128xf32, #tpu.memory_space<vmem>>, vector<1x128xf32>
      %33 = vector.broadcast %31 : vector<8x1xf32> to vector<8x128xf32>
      %34 = vector.broadcast %32 : vector<1x128xf32> to vector<8x128xf32>
      %35 = arith.subf %33, %34 : vector<8x128xf32>
      %c1_27 = arith.constant 1 : index
      %36 = memref.load %arg5[%c1_27] : memref<2xf32, #tpu.memory_space<smem>>
      %37 = vector.broadcast %36 : f32 to vector<8x128xf32>
      %38 = arith.mulf %37, %35 : vector<8x128xf32>
      %39 = arith.mulf %38, %35 : vector<8x128xf32>
      %40 = math.exp %39 : vector<8x128xf32>
      %c1_28 = arith.constant 1 : index
      %c0_29 = arith.constant 0 : index
      %c0_30 = arith.constant 0 : index
      %41 = vector.load %arg7[%c1_28, %c0_29, %c0_30] : memref<2x128x128xf32, #tpu.memory_space<vmem>>, vector<1x128x128xf32>
      %42 = vector.shape_cast %41 : vector<1x128x128xf32> to vector<128x128xf32>
      %cst_31 = arith.constant dense<0.000000e+00> : vector<8x128xf32>
      %43 = tpu.matmul %40, %42, %cst_31 {dimension_numbers = #tpu.dot_dimension_numbers<[1], [0], [0], [1], [0, 0, 1, 1], [], []>} : vector<8x128xf32>, vector<128x128xf32>, vector<8x128xf32> -> vector<8x128xf32>
      %44 = arith.addf %30, %43 : vector<8x128xf32>
      %c0_32 = arith.constant 0 : index
      %c0_33 = arith.constant 0 : index
      %45 = vector.load %arg8[%c0_32, %c0_33] : memref<1x128xf32, #tpu.memory_space<vmem>>, vector<1x128xf32>
      %46 = vector.broadcast %45 : vector<1x128xf32> to vector<8x128xf32>
      %47 = arith.addf %44, %46 : vector<8x128xf32>
      %c0_34 = arith.constant 0 : index
      %c0_35 = arith.constant 0 : index
      %48 = vector.load %arg9[%c0_34, %c0_35] : memref<8x128xf32, #tpu.memory_space<vmem>>, vector<8x128xf32>
      tpu.vector_store %arg9[%c0_34, %c0_35], %47 {strides = array<i32>} : memref<8x128xf32, #tpu.memory_space<vmem>>, vector<8x128xf32>,
    } else {
    }
    return
  }
  func.func @transform_0(%arg0: i32, %arg1: i32) -> (i32, i32, i32) {
    %c0_i32 = arith.constant 0 : i32
    %c0_i32_0 = arith.constant 0 : i32
    return %arg0, %arg1, %c0_i32 : i32, i32, i32
  }
  func.func @transform_1(%arg0: i32, %arg1: i32) -> (i32, i32) {
    %c0_i32 = arith.constant 0 : i32
    %c0_i32_0 = arith.constant 0 : i32
    return %arg0, %c0_i32 : i32, i32
  }
  func.func @transform_2(%arg0: i32, %arg1: i32) -> (i32, i32) {
    %c0_i32 = arith.constant 0 : i32
    %c0_i32_0 = arith.constant 0 : i32
    %c0_i32_1 = arith.constant 0 : i32
    return %c0_i32, %c0_i32_0 : i32, i32
  }
  func.func @transform_3(%arg0: i32, %arg1: i32) -> i32 {
    %c0_i32 = arith.constant 0 : i32
    %c0_i32_0 = arith.constant 0 : i32
    return %c0_i32 : i32
  }
  func.func @transform_4(%arg0: i32, %arg1: i32) -> (i32, i32) {
    %c0_i32 = arith.constant 0 : i32
    %c0_i32_0 = arith.constant 0 : i32
    %c0_i32_1 = arith.constant 0 : i32
    return %c0_i32, %c0_i32_0 : i32, i32
  }
  func.func @transform_5(%arg0: i32, %arg1: i32) -> (i32, i32, i32) {
    %c0_i32 = arith.constant 0 : i32
    %c0_i32_0 = arith.constant 0 : i32
    %c0_i32_1 = arith.constant 0 : i32
    %c0_i32_2 = arith.constant 0 : i32
    return %c0_i32, %c0_i32_0, %c0_i32_1 : i32, i32, i32
  }
  func.func @transform_6(%arg0: i32, %arg1: i32) -> (i32, i32) {
    %c0_i32 = arith.constant 0 : i32
    %c0_i32_0 = arith.constant 0 : i32
    %c0_i32_1 = arith.constant 0 : i32
    return %c0_i32, %c0_i32_0 : i32, i32
  }
  func.func @transform_7(%arg0: i32, %arg1: i32) -> (i32, i32) {
    %c0_i32 = arith.constant 0 : i32
    %c0_i32_0 = arith.constant 0 : i32
    return %arg0, %c0_i32 : i32, i32
  }
}

</mosaic_0001>

<llo_original>
// kernel: tpu_custom_call.1
$region0: #{tpu_custom_call.1}
  #allocation0 [shape = 'u32[]', space=smem, size = 0x4, offset = 0x4, fixed_abs, tag = 'smem constant byte address 0x4 - core index']
  #allocation1 [shape = 'u32[144,128]{1,0:T(1,128)}', space=vmem, size = 0x12000, scoped, tag = 'internal scratch']
  #allocation2 [shape = 'f32[8,32]{1,0:T(8,128)}', space=vmem, size = 0x1000, scoped, tag = 'scratch operand']
  %s0 = inlined_call_operand.hbm [shape: bf16[8,8,32], index: 0, kind: input, shape index: {}]
  %s1 = inlined_call_operand.vmem [shape: f32[8,2], index: 1, kind: input, shape index: {}]
  %s2 = inlined_call_operand.vmem [shape: f32[2,128], index: 2, kind: input, shape index: {}]
  %s3 = inlined_call_operand.vmem [shape: f32[2], index: 3, kind: input, shape index: {}]
  %s4 = inlined_call_operand.hbm [shape: f32[32,128], index: 4, kind: input, shape index: {}]
  %s5 = inlined_call_operand.hbm [shape: f32[2,128,128], index: 5, kind: input, shape index: {}]
  %s6 = inlined_call_operand.vmem [shape: f32[1,128], index: 6, kind: input, shape index: {}]
  %s7 = inlined_call_operand.hbm [shape: f32[8,128], index: 7, kind: output, shape index: {}]
  %s8 = sld [smem:[#allocation0]]
  $region62: #{tpu_custom_call.1} parent=0
    _
  %s10 = ssub.s32 1, %s8
  %s11 = scalar_select 0, %s10, %s8
  $region1: #{tpu_custom_call.1} parent=0
    #allocation3 [shape = 'u8[16384]{0}', space=vmem, size = 0x4000, scoped, tag = 'input window, operand 0, single buffered']
    #allocation4 [shape = 's32[1]{0}', space=sflag, size = 0x4, scoped, tag = 'scoped memory for tpu_custom_call.1']
    #allocation5 [shape = 's32[1]{0}', space=sflag, size = 0x4, scoped, tag = 'scoped memory for tpu_custom_call.1']
    #allocation6 [shape = 's32[1]{0}', space=sflag, size = 0x4, scoped, tag = 'scoped memory for tpu_custom_call.1']
    #allocation7 [shape = 'u8[512]{0}', space=smem, size = 0x200, scoped, tag = 'input window, operand 3, single buffered']
    #allocation8 [shape = 'u8[16384]{0}', space=vmem, size = 0x4000, scoped, tag = 'input window, operand 4, single buffered']
    #allocation9 [shape = 's32[1]{0}', space=sflag, size = 0x4, scoped, tag = 'scoped memory for tpu_custom_call.1']
    #allocation10 [shape = 'u8[131072]{0}', space=vmem, size = 0x20000, scoped, tag = 'input window, operand 5, single buffered']
    #allocation11 [shape = 'u8[4096]{0}', space=vmem, size = 0x1000, scoped, tag = 'output window, operand 0, single buffered']
    %12 = vsyncpa [#allocation4], 0
    %13 = vsyncpa [#allocation6], 0
    %14 = vsyncpa [#allocation9], 0
    %15 = vsyncpa [#allocation5], 0
    // Predicated region
    $region2: #{tpu_custom_call.1} parent=1 // pred_check
      _
    $region3: #{tpu_custom_call.1} parent=1 // pred_check_branch
      %17 = sbr.rel (0) target = $region5
    $region4: #{tpu_custom_call.1} parent=1 // pred_region
      %s19 = ssub.s32 512, 512
      %20 = vsyncadd [#allocation4], %s19
      %s21 = sshll.u32 [#allocation3], 4
      %s22 = int_to_ptr.vmem [resolvable:$true] %s21
      %27 = dma.hbm_to_vmem [thread:$0]  %s0, 512, %s22, [#allocation4], 64, 64, 4
    $region5: #{tpu_custom_call.1} parent=1 // pred_fallthru
      _
    // Predicated region
    $region6: #{tpu_custom_call.1} parent=1 // pred_check
      _
    $region7: #{tpu_custom_call.1} parent=1 // pred_check_branch
      %29 = sbr.rel (0) target = $region9
    $region8: #{tpu_custom_call.1} parent=1 // pred_region
      _
    $region9: #{tpu_custom_call.1} parent=1 // pred_fallthru
      _
    // Predicated region
    $region10: #{tpu_custom_call.1} parent=1 // pred_check
      _
    $region11: #{tpu_custom_call.1} parent=1 // pred_check_branch
      %31 = sbr.rel (0) target = $region13
    $region12: #{tpu_custom_call.1} parent=1 // pred_region
      _
    $region13: #{tpu_custom_call.1} parent=1 // pred_fallthru
      _
    // Predicated region
    $region14: #{tpu_custom_call.1} parent=1 // pred_check
      _
    $region15: #{tpu_custom_call.1} parent=1 // pred_check_branch
      %33 = sbr.rel (0) target = $region17
    $region16: #{tpu_custom_call.1} parent=1 // pred_region
      %s35 = ssub.s32 16, 16
      %36 = vsyncadd [#allocation6], %s35
      %s38 = sshll.u32 %s3, 4
      %s39 = int_to_ptr.vmem [resolvable:$true] %s38
      %41 = dma.vmem_to_smem %s39, 16, [#allocation7], [#allocation6]
    $region17: #{tpu_custom_call.1} parent=1 // pred_fallthru
      _
    // Predicated region
    $region18: #{tpu_custom_call.1} parent=1 // pred_check
      _
    $region19: #{tpu_custom_call.1} parent=1 // pred_check_branch
      %43 = sbr.rel (0) target = $region21
    $region20: #{tpu_custom_call.1} parent=1 // pred_region
      %s45 = ssub.s32 512, 512
      %46 = vsyncadd [#allocation9], %s45
      %s47 = sshll.u32 [#allocation8], 4
      %s48 = int_to_ptr.vmem [resolvable:$true] %s47
      %53 = dma.hbm_to_vmem [thread:$0]  %s4, 512, %s48, [#allocation9], 128, 128, 8
    $region21: #{tpu_custom_call.1} parent=1 // pred_fallthru
      _
    // Predicated region
    $region22: #{tpu_custom_call.1} parent=1 // pred_check
      _
    $region23: #{tpu_custom_call.1} parent=1 // pred_check_branch
      %55 = sbr.rel (0) target = $region25
    $region24: #{tpu_custom_call.1} parent=1 // pred_region
      %s57 = ssub.s32 4096, 4096
      %58 = vsyncadd [#allocation9], %s57
      %s59 = sshll.u32 [#allocation10], 4
      %s60 = int_to_ptr.vmem [resolvable:$true] %s59
      %65 = dma.hbm_to_vmem [thread:$0]  %s5, 4096, %s60, [#allocation9], 128, 128, 8
    $region25: #{tpu_custom_call.1} parent=1 // pred_fallthru
      _
    // Predicated region
    $region26: #{tpu_custom_call.1} parent=1 // pred_check
      _
    $region27: #{tpu_custom_call.1} parent=1 // pred_check_branch
      %67 = sbr.rel (0) target = $region29
    $region28: #{tpu_custom_call.1} parent=1 // pred_region
      _
    $region29: #{tpu_custom_call.1} parent=1 // pred_fallthru
      _
    // Predicated region
    $region30: #{tpu_custom_call.1} parent=1 // pred_check
      _
    $region31: #{tpu_custom_call.1} parent=1 // pred_check_branch
      %69 = sbr.rel (0) target = $region33
    $region32: #{tpu_custom_call.1} parent=1 // pred_region
      %70 = dma.done [#allocation4], 512
    $region33: #{tpu_custom_call.1} parent=1 // pred_fallthru
      _
    // Predicated region
    $region34: #{tpu_custom_call.1} parent=1 // pred_check
      _
    $region35: #{tpu_custom_call.1} parent=1 // pred_check_branch
      %72 = sbr.rel (0) target = $region37
    $region36: #{tpu_custom_call.1} parent=1 // pred_region
      %73 = dma.done [#allocation6], 16
    $region37: #{tpu_custom_call.1} parent=1 // pred_fallthru
      _
    // Predicated region
    $region38: #{tpu_custom_call.1} parent=1 // pred_check
      _
    $region39: #{tpu_custom_call.1} parent=1 // pred_check_branch
      %75 = sbr.rel (0) target = $region41
    $region40: #{tpu_custom_call.1} parent=1 // pred_region
      %76 = dma.done [#allocation9], 512
    $region41: #{tpu_custom_call.1} parent=1 // pred_fallthru
      _
    // Predicated region
    $region42: #{tpu_custom_call.1} parent=1 // pred_check
      _
    $region43: #{tpu_custom_call.1} parent=1 // pred_check_branch
      %78 = sbr.rel (0) target = $region45
    $region44: #{tpu_custom_call.1} parent=1 // pred_region
      %79 = dma.done [#allocation9], 4096
    $region45: #{tpu_custom_call.1} parent=1 // pred_fallthru
      _
    %80 = sfence
    %p81 = scmp.eq.s32.totalorder 0, 0
    // Predicated region
    $region46: #{tpu_custom_call.1} parent=1 // pred_check
      %p82 = pneg %p81
    $region47: #{tpu_custom_call.1} parent=1 // pred_check_branch
      %84 = sbr.rel (%p82) target = $region49
    $region48: #{tpu_custom_call.1} parent=1 // pred_region
      %vm85 = vcmask 261120
      %86 = vst.msk [vmem:[#allocation2] sm:$0xff] %vm85, 0.0
    $region49: #{tpu_custom_call.1} parent=1 // pred_fallthru
      _
    %v87 = vld [vmem:[#allocation2] sm:$0xff]
    %v88 = vld [vmem:[#allocation3] sm:$0xf]
    %v89 = vld [vmem:[#allocation3 + $0x4] sm:$0xf]
    %v90 = vld [vmem:[#allocation3 + $0x8] sm:$0xf]
    %v91 = vld [vmem:[#allocation3 + $0xc] sm:$0xf]
    %v92 = vld [vmem:[#allocation3 + $0x10] sm:$0xf]
    %v93 = vld [vmem:[#allocation3 + $0x14] sm:$0xf]
    %v94 = vld [vmem:[#allocation3 + $0x18] sm:$0xf]
    %v95 = vld [vmem:[#allocation3 + $0x1c] sm:$0xf]
    %v96 = vunpack.c.l.bf16 %v88
    %v97 = vunpack.c.l.bf16 %v89
    %v98 = vunpack.c.l.bf16 %v90
    %v99 = vunpack.c.l.bf16 %v91
    %v100 = vunpack.c.l.bf16 %v92
    %v101 = vunpack.c.l.bf16 %v93
    %v102 = vunpack.c.l.bf16 %v94
    %v103 = vunpack.c.l.bf16 %v95
    %vm104 = vcmask 261120
    %v105 = vsel %vm104, %v96, 0.0
    %v106 = vrot.slane %v105, 4
    %v107 = vadd.f32 %v105, %v106
    %v108 = vrot.slane %v107, 2
    %v109 = vadd.f32 %v107, %v108
    %v110 = vrot.slane %v109, 1
    %v111 = vadd.f32 %v109, %v110
    %v112 = vsel %vm104, %v97, 0.0
    %v113 = vrot.slane %v112, 4
    %v114 = vadd.f32 %v112, %v113
    %v115 = vrot.slane %v114, 2
    %v116 = vadd.f32 %v114, %v115
    %v117 = vrot.slane %v116, 1
    %v118 = vadd.f32 %v116, %v117
    %v119 = vsel %vm104, %v98, 0.0
    %v120 = vrot.slane %v119, 4
    %v121 = vadd.f32 %v119, %v120
    %v122 = vrot.slane %v121, 2
    %v123 = vadd.f32 %v121, %v122
    %v124 = vrot.slane %v123, 1
    %v125 = vadd.f32 %v123, %v124
    %v126 = vsel %vm104, %v99, 0.0
    %v127 = vrot.slane %v126, 4
    %v128 = vadd.f32 %v126, %v127
    %v129 = vrot.slane %v128, 2
    %v130 = vadd.f32 %v128, %v129
    %v131 = vrot.slane %v130, 1
    %v132 = vadd.f32 %v130, %v131
    %v133 = vsel %vm104, %v100, 0.0
    %v134 = vrot.slane %v133, 4
    %v135 = vadd.f32 %v133, %v134
    %v136 = vrot.slane %v135, 2
    %v137 = vadd.f32 %v135, %v136
    %v138 = vrot.slane %v137, 1
    %v139 = vadd.f32 %v137, %v138
    %v140 = vsel %vm104, %v101, 0.0
    %v141 = vrot.slane %v140, 4
    %v142 = vadd.f32 %v140, %v141
    %v143 = vrot.slane %v142, 2
    %v144 = vadd.f32 %v142, %v143
    %v145 = vrot.slane %v144, 1
    %v146 = vadd.f32 %v144, %v145
    %v147 = vsel %vm104, %v102, 0.0
    %v148 = vrot.slane %v147, 4
    %v149 = vadd.f32 %v147, %v148
    %v150 = vrot.slane %v149, 2
    %v151 = vadd.f32 %v149, %v150
    %v152 = vrot.slane %v151, 1
    %v153 = vadd.f32 %v151, %v152
    %v154 = vsel %vm104, %v103, 0.0
    %v155 = vrot.slane %v154, 4
    %v156 = vadd.f32 %v154, %v155
    %v157 = vrot.slane %v156, 2
    %v158 = vadd.f32 %v156, %v157
    %v159 = vrot.slane %v158, 1
    %v160 = vadd.f32 %v158, %v159
    %vm169 = vcmask 1041409
    %v170 = vsel %vm169, %v118, %v111
    %vm171 = vcmask 1042434
    %v172 = vsel %vm171, %v125, %v170
    %vm173 = vcmask 1043459
    %v174 = vsel %vm173, %v132, %v172
    %vm175 = vcmask 1044484
    %v176 = vsel %vm175, %v139, %v174
    %vm177 = vcmask 1045509
    %v178 = vsel %vm177, %v146, %v176
    %vm179 = vcmask 1046534
    %v180 = vsel %vm179, %v153, %v178
    %vm181 = vcmask 1047559
    %v182 = vsel %vm181, %v160, %v180
    %v184 = vadd.f32 %v87, %v182
    %185 = vst.msk [vmem:[#allocation2] sm:$0xff] %vm104, %v184
    // Predicated region
    $region50: #{tpu_custom_call.1} parent=1 // pred_check
      %p186 = pneg %p81
    $region51: #{tpu_custom_call.1} parent=1 // pred_check_branch
      %188 = sbr.rel (%p186) target = $region53
    $region52: #{tpu_custom_call.1} parent=1 // pred_region
      %v189 = vld [vmem:[#allocation2] sm:$0xff]
      %v190 = vmul.f32 %v189, 0.125
      %v191 = vld [vmem:[#allocation8] sm:$0xff]
      %v192 = vld [vmem:[#allocation8 + $0x8] sm:$0xff]
      %v193 = vld [vmem:[#allocation8 + $0x10] sm:$0xff]
      %v194 = vld [vmem:[#allocation8 + $0x18] sm:$0xff]
      %v195 = vld [vmem:[%s1] sm:$0xff]
      %v196 = vld [vmem:[%s2] sm:$0x1]
      %198 = vset.pattern.permute.xlu0 0
      %199 = vperm.xlu0 %198, %v195
      %v200 = vpop.permute.xlu0 %199
      %v202 = vlaneseq
      %v203 = vshrl.u32 %v202, 7
      %v204 = vsub.s32 0, %v203
      %v205 = vrot.slane %v196, %v204
      %v206 = vsub.f32 %v200, %v205
      %s207 = sld [smem:[#allocation7]]
      %v208 = vstv %s207
      %v209 = vmul.f32 %v208, %v206
      %v210 = vmul.f32 %v209, %v206
      %v211 = vmul.f32 %v210, 1.442695
      %v212 = vpow.pop %v211
      %v213 = vld [vmem:[#allocation10] sm:$0xff]
      %v214 = vld [vmem:[#allocation10 + $0x8] sm:$0xff]
      %v215 = vld [vmem:[#allocation10 + $0x10] sm:$0xff]
      %v216 = vld [vmem:[#allocation10 + $0x18] sm:$0xff]
      %v217 = vld [vmem:[#allocation10 + $0x20] sm:$0xff]
      %v218 = vld [vmem:[#allocation10 + $0x28] sm:$0xff]
      %v219 = vld [vmem:[#allocation10 + $0x30] sm:$0xff]
      %v220 = vld [vmem:[#allocation10 + $0x38] sm:$0xff]
      %v221 = vld [vmem:[#allocation10 + $0x40] sm:$0xff]
      %v222 = vld [vmem:[#allocation10 + $0x48] sm:$0xff]
      %v223 = vld [vmem:[#allocation10 + $0x50] sm:$0xff]
      %v224 = vld [vmem:[#allocation10 + $0x58] sm:$0xff]
      %v225 = vld [vmem:[#allocation10 + $0x60] sm:$0xff]
      %v226 = vld [vmem:[#allocation10 + $0x68] sm:$0xff]
      %v227 = vld [vmem:[#allocation10 + $0x70] sm:$0xff]
      %v228 = vld [vmem:[#allocation10 + $0x78] sm:$0xff]
      %229 = vmatprep.subr.mxu0 0.0
      %230 = vmatpush1.msra.mxu0 %v213
      %231 = vmatprep.subr.mxu0 0.0
      %232 = vmatpush1.msra.mxu0 %v214
      %233 = vmatprep.subr.mxu0 0.0
      %234 = vmatpush1.msra.mxu0 %v215
      %235 = vmatprep.subr.mxu0 0.0
      %236 = vmatpush1.msra.mxu0 %v216
      %237 = vmatprep.subr.mxu0 0.0
      %238 = vmatpush1.msra.mxu0 %v217
      %239 = vmatprep.subr.mxu0 0.0
      %240 = vmatpush1.msra.mxu0 %v218
      %241 = vmatprep.subr.mxu0 0.0
      %242 = vmatpush1.msra.mxu0 %v219
      %243 = vmatprep.subr.mxu0 0.0
      %244 = vmatpush1.msra.mxu0 %v220
      %245 = vmatprep.subr.mxu0 0.0
      %246 = vmatpush1.msra.mxu0 %v221
      %247 = vmatprep.subr.mxu0 0.0
      %248 = vmatpush1.msra.mxu0 %v222
      %249 = vmatprep.subr.mxu0 0.0
      %250 = vmatpush1.msra.mxu0 %v223
      %251 = vmatprep.subr.mxu0 0.0
      %252 = vmatpush1.msra.mxu0 %v224
      %253 = vmatprep.subr.mxu0 0.0
      %254 = vmatpush1.msra.mxu0 %v225
      %255 = vmatprep.subr.mxu0 0.0
      %256 = vmatpush1.msra.mxu0 %v226
      %257 = vmatprep.subr.mxu0 0.0
      %258 = vmatpush1.msra.mxu0 %v227
      %259 = vmatprep.subr.mxu0 0.0
      %260 = vmatpush1.msra.mxu0 %v228
      %261 = vmatprep.subr.mxu0 0.0
      %262 = vmatpush1.msra.mxu0 0.0
      %263 = vmatprep.subr.mxu0 0.0
      %264 = vmatpush1.msra.mxu0 0.0
      %265 = vmatprep.subr.mxu0 0.0
      %266 = vmatpush1.msra.mxu0 0.0
      %267 = vmatprep.subr.mxu0 0.0
      %268 = vmatpush1.msra.mxu0 0.0
      %269 = vmatprep.subr.mxu0 0.0
      %270 = vmatpush1.msra.mxu0 0.0
      %271 = vmatprep.subr.mxu0 0.0
      %272 = vmatpush1.msra.mxu0 0.0
      %273 = vmatprep.subr.mxu0 0.0
      %274 = vmatpush1.msra.mxu0 0.0
      %275 = vmatprep.subr.mxu0 0.0
      %276 = vmatpush1.msra.mxu0 0.0
      %277 = vmatprep.subr.mxu0 0.0
      %278 = vmatpush1.msra.mxu0 0.0
      %279 = vmatprep.subr.mxu0 0.0
      %280 = vmatpush1.msra.mxu0 0.0
      %281 = vmatprep.subr.mxu0 0.0
      %282 = vmatpush1.msra.mxu0 0.0
      %283 = vmatprep.subr.mxu0 0.0
      %284 = vmatpush1.msra.mxu0 0.0
      %285 = vmatprep.subr.mxu0 0.0
      %286 = vmatpush1.msra.mxu0 0.0
      %287 = vmatprep.subr.mxu0 0.0
      %288 = vmatpush1.msra.mxu0 0.0
      %289 = vmatprep.subr.mxu0 0.0
      %290 = vmatpush1.msra.mxu0 0.0
      %291 = vmatprep.subr.mxu0 0.0
      %292 = vmatpush1.msra.mxu0 0.0
      %293 = vmatprep.mubr.f32.mxu0 0.0
      %294 = vmatmul.mubr.f32.gmra.mrb[0].mxu0 %v212
      %v295 = vpop.f32.mrb[0].mxu0
      %v296 = vadd.f32 0.0, %v295
      %v297 = vpop.f32.mrb[0].mxu0
      %298 = vdwg.mxu0
      %v300 = vsel %vm104, %v190, 0
      %302 = vmatprep.subr.mxu0 0.0
      %303 = vmatpush1.msra.mxu0 %v191
      %304 = vmatprep.subr.mxu0 0.0
      %305 = vmatpush1.msra.mxu0 %v192
      %306 = vmatprep.subr.mxu0 0.0
      %307 = vmatpush1.msra.mxu0 %v193
      %308 = vmatprep.subr.mxu0 0.0
      %309 = vmatpush1.msra.mxu0 %v194
      %310 = vmatprep.subr.mxu0 0.0
      %311 = vmatpush1.msra.mxu0 0.0
      %312 = vmatprep.subr.mxu0 0.0
      %313 = vmatpush1.msra.mxu0 0.0
      %314 = vmatprep.subr.mxu0 0.0
      %315 = vmatpush1.msra.mxu0 0.0
      %316 = vmatprep.subr.mxu0 0.0
      %317 = vmatpush1.msra.mxu0 0.0
      %318 = vmatprep.subr.mxu0 0.0
      %319 = vmatpush1.msra.mxu0 0.0
      %320 = vmatprep.subr.mxu0 0.0
      %321 = vmatpush1.msra.mxu0 0.0
      %322 = vmatprep.subr.mxu0 0.0
      %323 = vmatpush1.msra.mxu0 0.0
      %324 = vmatprep.subr.mxu0 0.0
      %325 = vmatpush1.msra.mxu0 0.0
      %326 = vmatprep.subr.mxu0 0.0
      %327 = vmatpush1.msra.mxu0 0.0
      %328 = vmatprep.subr.mxu0 0.0
      %329 = vmatpush1.msra.mxu0 0.0
      %330 = vmatprep.subr.mxu0 0.0
      %331 = vmatpush1.msra.mxu0 0.0
      %332 = vmatprep.subr.mxu0 0.0
      %333 = vmatpush1.msra.mxu0 0.0
      %334 = vmatprep.subr.mxu0 0.0
      %335 = vmatpush1.msra.mxu0 0.0
      %336 = vmatprep.subr.mxu0 0.0
      %337 = vmatpush1.msra.mxu0 0.0
      %338 = vmatprep.subr.mxu0 0.0
      %339 = vmatpush1.msra.mxu0 0.0
      %340 = vmatprep.subr.mxu0 0.0
      %341 = vmatpush1.msra.mxu0 0.0
      %342 = vmatprep.subr.mxu0 0.0
      %343 = vmatpush1.msra.mxu0 0.0
      %344 = vmatprep.subr.mxu0 0.0
      %345 = vmatpush1.msra.mxu0 0.0
      %346 = vmatprep.subr.mxu0 0.0
      %347 = vmatpush1.msra.mxu0 0.0
      %348 = vmatprep.subr.mxu0 0.0
      %349 = vmatpush1.msra.mxu0 0.0
      %350 = vmatprep.subr.mxu0 0.0
      %351 = vmatpush1.msra.mxu0 0.0
      %352 = vmatprep.subr.mxu0 0.0
      %353 = vmatpush1.msra.mxu0 0.0
      %354 = vmatprep.subr.mxu0 0.0
      %355 = vmatpush1.msra.mxu0 0.0
      %356 = vmatprep.subr.mxu0 0.0
      %357 = vmatpush1.msra.mxu0 0.0
      %358 = vmatprep.subr.mxu0 0.0
      %359 = vmatpush1.msra.mxu0 0.0
      %360 = vmatprep.subr.mxu0 0.0
      %361 = vmatpush1.msra.mxu0 0.0
      %362 = vmatprep.subr.mxu0 0.0
      %363 = vmatpush1.msra.mxu0 0.0
      %364 = vmatprep.subr.mxu0 0.0
      %365 = vmatpush1.msra.mxu0 0.0
      %366 = vmatprep.mubr.f32.mxu0 0.0
      %367 = vmatmul.mubr.f32.gmra.mrb[0].mxu0 %v300
      %v368 = vpop.f32.mrb[0].mxu0
      %v369 = vadd.f32 %v296, %v368
      %v370 = vpop.f32.mrb[0].mxu0
      %371 = vdwg.mxu0
      %v372 = vld [vmem:[%s2 + $0x1] sm:$0x1]
      %373 = vset.pattern.permute.xlu0 1
      %374 = vperm.xlu0 %373, %v195
      %v375 = vpop.permute.xlu0 %374
      %v377 = vlaneseq
      %v378 = vshrl.u32 %v377, 7
      %v379 = vsub.s32 0, %v378
      %v380 = vrot.slane %v372, %v379
      %v381 = vsub.f32 %v375, %v380
      %s382 = sld [smem:[#allocation7 + $0x1]]
      %v383 = vstv %s382
      %v384 = vmul.f32 %v383, %v381
      %v385 = vmul.f32 %v384, %v381
      %v386 = vmul.f32 %v385, 1.442695
      %v387 = vpow.pop %v386
      %s388 = scalar_lea.vmem [#allocation10], 128
      %v389 = vld [vmem:[%s388] sm:$0xff]
      %v390 = vld [vmem:[%s388 + $0x8] sm:$0xff]
      %v391 = vld [vmem:[%s388 + $0x10] sm:$0xff]
      %v392 = vld [vmem:[%s388 + $0x18] sm:$0xff]
      %v393 = vld [vmem:[%s388 + $0x20] sm:$0xff]
      %v394 = vld [vmem:[%s388 + $0x28] sm:$0xff]
      %v395 = vld [vmem:[%s388 + $0x30] sm:$0xff]
      %v396 = vld [vmem:[%s388 + $0x38] sm:$0xff]
      %v397 = vld [vmem:[%s388 + $0x40] sm:$0xff]
      %v398 = vld [vmem:[%s388 + $0x48] sm:$0xff]
      %v399 = vld [vmem:[%s388 + $0x50] sm:$0xff]
      %v400 = vld [vmem:[%s388 + $0x58] sm:$0xff]
      %v401 = vld [vmem:[%s388 + $0x60] sm:$0xff]
      %v402 = vld [vmem:[%s388 + $0x68] sm:$0xff]
      %v403 = vld [vmem:[%s388 + $0x70] sm:$0xff]
      %v404 = vld [vmem:[%s388 + $0x78] sm:$0xff]
      %405 = vmatprep.subr.mxu0 0.0
      %406 = vmatpush1.msra.mxu0 %v389
      %407 = vmatprep.subr.mxu0 0.0
      %408 = vmatpush1.msra.mxu0 %v390
      %409 = vmatprep.subr.mxu0 0.0
      %410 = vmatpush1.msra.mxu0 %v391
      %411 = vmatprep.subr.mxu0 0.0
      %412 = vmatpush1.msra.mxu0 %v392
      %413 = vmatprep.subr.mxu0 0.0
      %414 = vmatpush1.msra.mxu0 %v393
      %415 = vmatprep.subr.mxu0 0.0
      %416 = vmatpush1.msra.mxu0 %v394
      %417 = vmatprep.subr.mxu0 0.0
      %418 = vmatpush1.msra.mxu0 %v395
      %419 = vmatprep.subr.mxu0 0.0
      %420 = vmatpush1.msra.mxu0 %v396
      %421 = vmatprep.subr.mxu0 0.0
      %422 = vmatpush1.msra.mxu0 %v397
      %423 = vmatprep.subr.mxu0 0.0
      %424 = vmatpush1.msra.mxu0 %v398
      %425 = vmatprep.subr.mxu0 0.0
      %426 = vmatpush1.msra.mxu0 %v399
      %427 = vmatprep.subr.mxu0 0.0
      %428 = vmatpush1.msra.mxu0 %v400
      %429 = vmatprep.subr.mxu0 0.0
      %430 = vmatpush1.msra.mxu0 %v401
      %431 = vmatprep.subr.mxu0 0.0
      %432 = vmatpush1.msra.mxu0 %v402
      %433 = vmatprep.subr.mxu0 0.0
      %434 = vmatpush1.msra.mxu0 %v403
      %435 = vmatprep.subr.mxu0 0.0
      %436 = vmatpush1.msra.mxu0 %v404
      %437 = vmatprep.subr.mxu0 0.0
      %438 = vmatpush1.msra.mxu0 0.0
      %439 = vmatprep.subr.mxu0 0.0
      %440 = vmatpush1.msra.mxu0 0.0
      %441 = vmatprep.subr.mxu0 0.0
      %442 = vmatpush1.msra.mxu0 0.0
      %443 = vmatprep.subr.mxu0 0.0
      %444 = vmatpush1.msra.mxu0 0.0
      %445 = vmatprep.subr.mxu0 0.0
      %446 = vmatpush1.msra.mxu0 0.0
      %447 = vmatprep.subr.mxu0 0.0
      %448 = vmatpush1.msra.mxu0 0.0
      %449 = vmatprep.subr.mxu0 0.0
      %450 = vmatpush1.msra.mxu0 0.0
      %451 = vmatprep.subr.mxu0 0.0
      %452 = vmatpush1.msra.mxu0 0.0
      %453 = vmatprep.subr.mxu0 0.0
      %454 = vmatpush1.msra.mxu0 0.0
      %455 = vmatprep.subr.mxu0 0.0
      %456 = vmatpush1.msra.mxu0 0.0
      %457 = vmatprep.subr.mxu0 0.0
      %458 = vmatpush1.msra.mxu0 0.0
      %459 = vmatprep.subr.mxu0 0.0
      %460 = vmatpush1.msra.mxu0 0.0
      %461 = vmatprep.subr.mxu0 0.0
      %462 = vmatpush1.msra.mxu0 0.0
      %463 = vmatprep.subr.mxu0 0.0
      %464 = vmatpush1.msra.mxu0 0.0
      %465 = vmatprep.subr.mxu0 0.0
      %466 = vmatpush1.msra.mxu0 0.0
      %467 = vmatprep.subr.mxu0 0.0
      %468 = vmatpush1.msra.mxu0 0.0
      %469 = vmatprep.mubr.f32.mxu0 0.0
      %470 = vmatmul.mubr.f32.gmra.mrb[0].mxu0 %v387
      %v471 = vpop.f32.mrb[0].mxu0
      %v472 = vadd.f32 0.0, %v471
      %v473 = vpop.f32.mrb[0].mxu0
      %474 = vdwg.mxu0
      %v475 = vadd.f32 %v369, %v472
      %v476 = vld [vmem:[%s6] sm:$0x1]
      %v478 = vlaneseq
      %v479 = vshrl.u32 %v478, 7
      %v480 = vsub.s32 0, %v479
      %v481 = vrot.slane %v476, %v480
      %v483 = vadd.f32 %v475, %v481
      %484 = vst [vmem:[#allocation11] sm:$0xff] %v483
    $region53: #{tpu_custom_call.1} parent=1 // pred_fallthru
      _
    // Predicated region
    $region54: #{tpu_custom_call.1} parent=1 // pred_check
      _
    $region55: #{tpu_custom_call.1} parent=1 // pred_check_branch
      %486 = sbr.rel (0) target = $region57
    $region56: #{tpu_custom_call.1} parent=1 // pred_region
      %s488 = ssub.s32 128, 128
      %489 = vsyncadd [#allocation5], %s488
      %s491 = sshll.u32 [#allocation11], 4
      %s492 = int_to_ptr.vmem [resolvable:$true] %s491
      %494 = dma.vmem_to_hbm [thread:$0]  %s492, 128, %s7, [#allocation5]
    $region57: #{tpu_custom_call.1} parent=1 // pred_fallthru
      _
    // Predicated region
    $region58: #{tpu_custom_call.1} parent=1 // pred_check
      _
    $region59: #{tpu_custom_call.1} parent=1 // pred_check_branch
      %496 = sbr.rel (0) target = $region61
    $region60: #{tpu_custom_call.1} parent=1 // pred_region
      %497 = dma.done [#allocation5], 128
    $region61: #{tpu_custom_call.1} parent=1 // pred_fallthru
      _
    %498 = vsyncpa [#allocation4], 1
    %499 = vsyncpa [#allocation9], 1
    %500 = vsyncpa [#allocation5], 1
    %501 = vsyncpa [#allocation6], 1

</llo_original>
